<compile_context>
chip_gen: v6e
topology: v6e:2x2x1
jax: 0.10.0
libtpu: 0.0.40
codegen_flags: <defaults>
</compile_context>

<pallas_src>
import functools
import math

import jax
import jax.numpy as jnp
from jax.experimental import pallas as pl
from jax.experimental.pallas import tpu as pltpu


# ----------------------------------------------------------------------------
# VMEM budgeting (generation-aware; conservative fallback = v7x 64 MiB per TC).
# ----------------------------------------------------------------------------
@functools.lru_cache(maxsize=None)
def _vmem_budget():
    cap = 64 * 1024 * 1024
    try:
        info = pltpu.get_tpu_info()
        c = getattr(info, "vmem_capacity_bytes", None)
        if c:
            cap = int(c)
    except Exception:
        pass
    vmem_limit = max(32 << 20, min(cap // 2, 64 << 20))
    # 1 streamed input + 1 output, each double-buffered -> 4 live blocks; ~25% headroom.
    block_bytes = (vmem_limit * 3) // 16
    return vmem_limit, block_bytes


def _rows_and_tile(total, lane_width, itemsize):
    """Rows of the flat slab and a budgeted, sublane-aligned row tile."""
    rows = pl.cdiv(total, lane_width)
    if rows <= 8:
        return rows, rows                        # single tiny (full-array) block
    _, block_bytes = _vmem_budget()
    max_tile = max(8, (block_bytes // (lane_width * itemsize)) // 8 * 8)
    tile = min(max_tile, ((rows + 7) // 8) * 8)
    if tile >= rows:
        # Never emit a 1-step grid for non-tiny inputs: give both v7x TensorCores work.
        tile = max(8, ((((rows + 1) // 2) + 7) // 8) * 8)
    return rows, tile


def _to_rows(x_flat, total, rows, lane_width):
    padded = rows * lane_width
    if padded != total:                          # pads at most lane_width-1 elements
        x_flat = jnp.pad(x_flat, (0, padded - total))
    return x_flat.reshape(rows, lane_width)


def _from_rows(rows2d, total, orig_shape):
    flat = rows2d.reshape(-1)
    if flat.shape[0] != total:
        flat = flat[:total]
    return flat.reshape(orig_shape)


# ----------------------------------------------------------------------------
# Scalar activation kernel: elementwise sigmoid (layout-agnostic -> flat slab).
# ----------------------------------------------------------------------------
def _scalar_sigmoid_kernel(s_ref, o_ref):
    x = s_ref[...].astype(jnp.float32)
    # sigmoid(x) == 0.5 * tanh(0.5 * x) + 0.5 : one EUP push instead of exp + divide.
    o_ref[...] = (0.5 * jnp.tanh(0.5 * x) + 0.5).astype(o_ref.dtype)


def scalar_sigmoid(s, *, lane_width=512):
    """sigmoid(s) for arbitrary shape; computed in f32, I/O in the caller's dtype."""
    orig_shape = s.shape
    total = math.prod(orig_shape) if orig_shape else 1
    rows, tile = _rows_and_tile(total, lane_width, jnp.dtype(s.dtype).itemsize)
    s2 = _to_rows(s.reshape(-1), total, rows, lane_width)
    vmem_limit, _ = _vmem_budget()

    out = pl.pallas_call(
        _scalar_sigmoid_kernel,
        out_shape=jax.ShapeDtypeStruct((rows, lane_width), s.dtype),
        grid=(pl.cdiv(rows, tile),),
        in_specs=[pl.BlockSpec((tile, lane_width), lambda i: (i, 0))],
        out_specs=pl.BlockSpec((tile, lane_width), lambda i: (i, 0)),
        compiler_params=pltpu.CompilerParams(
            dimension_semantics=("parallel",),
            vmem_limit_bytes=vmem_limit,
        ),
    )(s2)
    return _from_rows(out, total, orig_shape)


# ----------------------------------------------------------------------------
# Vector projection kernel (VectorProjection.forward), transpose-free layout:
#   flat index f = (..., d, c) row-major; rows of width L = lcm(3*D, 128) so the
#   weight pattern and the 3-lane group structure are identical on every row.
#   dot over each group of 3 lanes = x*w + sum_s roll(x, s) * w_s, with the
#   masked pre-shifted weight rows w_s precomputed in the wrapper.
# ----------------------------------------------------------------------------
def _vector_projection_kernel(x_ref, c_ref, o_ref):
    x = x_ref[...].astype(jnp.float32)           # (TR, L), flat (..., n_dims, xyz) order
    lanes = x.shape[-1]
    w = c_ref[0:1, :]                            # (1, L) base weights, period 3*n_dims
    dot = x * w
    dot = dot + pltpu.roll(x, 1, 1) * c_ref[1:2, :]
    dot = dot + pltpu.roll(x, 2, 1) * c_ref[2:3, :]
    dot = dot + pltpu.roll(x, lanes - 1, 1) * c_ref[3:4, :]
    dot = dot + pltpu.roll(x, lanes - 2, 1) * c_ref[4:5, :]
    # where(dot >= 0, x, x - dot * w)  ==  x - min(dot, 0) * w
    o_ref[...] = (x - jnp.minimum(dot, 0.0) * w).astype(o_ref.dtype)


def vector_projection(x_v, vecs_v):
    """x_v: (*, D, 3), vecs_v: (D, 3). Same shape/dtype output."""
    orig_shape = x_v.shape
    D = orig_shape[-2]
    assert orig_shape[-1] == 3 and vecs_v.shape == (D, 3)
    total = math.prod(orig_shape)

    period = 3 * D
    lane_width = (period * 128) // math.gcd(period, 128)       # lcm(3*D, 128)
    rows, tile = _rows_and_tile(total, lane_width, jnp.dtype(x_v.dtype).itemsize)
    x2 = _to_rows(x_v.reshape(-1), total, rows, lane_width)

    # Constant rows (single tiny block, constant index_map -> fetched once):
    #   row 0       = weights (period 3*D)
    #   rows 1..4   = weights pre-shifted by s in {1, 2, L-1, L-2} and masked to zero where
    #                 the shifted lane comes from a different 3-group (or wraps the row)
    #   rows 5..7   = zero padding to a full 8-sublane block
    w = jnp.tile(vecs_v.astype(jnp.float32).reshape(-1), lane_width // period)   # (L,)
    gid = jnp.arange(lane_width, dtype=jnp.int32) // 3
    const_rows = [w]
    for s in (1, 2, lane_width - 1, lane_width - 2):
        same = jnp.roll(gid, s) == gid
        const_rows.append(jnp.where(same, jnp.roll(w, s), 0.0))
    const_rows += [jnp.zeros_like(w)] * 3
    consts = jnp.stack(const_rows, axis=0)                                       # (8, L)

    vmem_limit, _ = _vmem_budget()
    out = pl.pallas_call(
        _vector_projection_kernel,
        out_shape=jax.ShapeDtypeStruct((rows, lane_width), x_v.dtype),
        grid=(pl.cdiv(rows, tile),),
        in_specs=[
            pl.BlockSpec((tile, lane_width), lambda i: (i, 0)),
            pl.BlockSpec((8, lane_width), lambda i: (0, 0)),
        ],
        out_specs=pl.BlockSpec((tile, lane_width), lambda i: (i, 0)),
        compiler_params=pltpu.CompilerParams(
            dimension_semantics=("parallel",),
            vmem_limit_bytes=vmem_limit,
        ),
    )(x2, consts)
    return _from_rows(out, total, orig_shape)


# ----------------------------------------------------------------------------
# SVActivation.forward: scalar act (sigmoid) on x.s, vector act (project) on x.v.
# ----------------------------------------------------------------------------
def sv_activation(s, v, vecs_v):
    s_out = scalar_sigmoid(s) if s is not None else None
    v_out = vector_projection(v, vecs_v) if v is not None else None
    return s_out, v_out


# ----------------------------------------------------------------------------
# Pure-JAX reference (semantics of the PyTorch module).
# ----------------------------------------------------------------------------
def sv_activation_ref(s, v, vecs_v):
    s_out = jax.nn.sigmoid(s)
    dot = jnp.sum(vecs_v * v, axis=-1, keepdims=True)   # (*, D, 1)
    v_proj = v - dot * vecs_v
    v_out = jnp.where(dot >= 0, v, v_proj)
    return s_out, v_out


if __name__ == "__main__":
    key = jax.random.PRNGKey(0)
    ks, kv, kp = jax.random.split(key, 3)

    # Small shapes implied by the module: batch, tokens, scalar channels, vector channels.
    B, N, C, D = 2, 8, 32, 4
    s = jax.random.normal(ks, (B, N, C), dtype=jnp.float32)
    v = jax.random.normal(kv, (B, N, D, 3), dtype=jnp.float32)
    # nn.Parameter(torch.randn([n_dims, 3])); forward uses the weight-norm direction vecs_v.
    vecs_v = jax.random.normal(kp, (D, 3), dtype=jnp.float32)

    fused = jax.jit(sv_activation)
    s_out, v_out = fused(s, v, vecs_v)
    jax.block_until_ready((s_out, v_out))

    s_ref, v_ref = sv_activation_ref(s, v, vecs_v)
    assert s_out.shape == s.shape and v_out.shape == v.shape
    assert jnp.allclose(s_out, s_ref, atol=1e-5, rtol=1e-5)
    assert jnp.allclose(v_out, v_ref, atol=1e-5, rtol=1e-5)

    # Second small case exercising the multi-step grid + ragged last block path.
    B2, N2, C2 = 4, 80, 37
    s2 = jax.random.normal(ks, (B2, N2, C2), dtype=jnp.float32)
    v2 = jax.random.normal(kv, (B2, N2, D, 3), dtype=jnp.float32)
    s2_out, v2_out = fused(s2, v2, vecs_v)
    jax.block_until_ready((s2_out, v2_out))
    s2_ref, v2_ref = sv_activation_ref(s2, v2, vecs_v)
    assert jnp.allclose(s2_out, s2_ref, atol=1e-5, rtol=1e-5)
    assert jnp.allclose(v2_out, v2_ref, atol=1e-5, rtol=1e-5)

    print("KERNEL_OK")
</pallas_src>

<mosaic_0001>
module attributes {stable_mosaic.version = 11 : i64} {
  func.func @_vector_projection_kernel(%arg0: i32, %arg1: memref<1x384xf32, #tpu.memory_space<vmem>>, %arg2: memref<8x384xf32, #tpu.memory_space<vmem>>, %arg3: memref<1x384xf32, #tpu.memory_space<vmem>>) attributes {dimension_semantics = [#tpu.dimension_semantics<parallel>], iteration_bounds = array<i64: 1>, scalar_prefetch = 0 : i64, scratch_operands = 0 : i64, tpu.core_type = #tpu.core_type<tc>, window_params = [{transform_indices = @transform_0, window_bounds = array<i64: 1, 384>}, {pipeline_mode = #tpu.pipeline_mode<synchronous>, transform_indices = @transform_1, window_bounds = array<i64: 8, 384>}, {transform_indices = @transform_2, window_bounds = array<i64: 1, 384>}]} {
    %c0 = arith.constant 0 : index
    %c0_0 = arith.constant 0 : index
    %0 = vector.load %arg1[%c0, %c0_0] : memref<1x384xf32, #tpu.memory_space<vmem>>, vector<1x384xf32>
    %c0_1 = arith.constant 0 : index
    %c0_2 = arith.constant 0 : index
    %1 = vector.load %arg2[%c0_1, %c0_2] : memref<8x384xf32, #tpu.memory_space<vmem>>, vector<1x384xf32>
    %2 = arith.mulf %0, %1 : vector<1x384xf32>
    %c1_i32 = arith.constant 1 : i32
    %3 = tpu.dynamic_rotate %0 by %c1_i32 dim 1 : vector<1x384xf32>, i32 -> vector<1x384xf32>
    %c1 = arith.constant 1 : index
    %c0_3 = arith.constant 0 : index
    %4 = vector.load %arg2[%c1, %c0_3] : memref<8x384xf32, #tpu.memory_space<vmem>>, vector<1x384xf32>
    %5 = arith.mulf %3, %4 : vector<1x384xf32>
    %6 = arith.addf %2, %5 : vector<1x384xf32>
    %c2_i32 = arith.constant 2 : i32
    %7 = tpu.dynamic_rotate %0 by %c2_i32 dim 1 : vector<1x384xf32>, i32 -> vector<1x384xf32>
    %c2 = arith.constant 2 : index
    %c0_4 = arith.constant 0 : index
    %8 = vector.load %arg2[%c2, %c0_4] : memref<8x384xf32, #tpu.memory_space<vmem>>, vector<1x384xf32>
    %9 = arith.mulf %7, %8 : vector<1x384xf32>
    %10 = arith.addf %6, %9 : vector<1x384xf32>
    %c383_i32 = arith.constant 383 : i32
    %11 = tpu.dynamic_rotate %0 by %c383_i32 dim 1 : vector<1x384xf32>, i32 -> vector<1x384xf32>
    %c3 = arith.constant 3 : index
    %c0_5 = arith.constant 0 : index
    %12 = vector.load %arg2[%c3, %c0_5] : memref<8x384xf32, #tpu.memory_space<vmem>>, vector<1x384xf32>
    %13 = arith.mulf %11, %12 : vector<1x384xf32>
    %14 = arith.addf %10, %13 : vector<1x384xf32>
    %c382_i32 = arith.constant 382 : i32
    %15 = tpu.dynamic_rotate %0 by %c382_i32 dim 1 : vector<1x384xf32>, i32 -> vector<1x384xf32>
    %c4 = arith.constant 4 : index
    %c0_6 = arith.constant 0 : index
    %16 = vector.load %arg2[%c4, %c0_6] : memref<8x384xf32, #tpu.memory_space<vmem>>, vector<1x384xf32>
    %17 = arith.mulf %15, %16 : vector<1x384xf32>
    %18 = arith.addf %14, %17 : vector<1x384xf32>
    %cst = arith.constant 0.000000e+00 : f32
    %19 = vector.broadcast %cst : f32 to vector<1x384xf32>
    %20 = arith.minimumf %18, %19 : vector<1x384xf32>
    %21 = arith.mulf %20, %1 : vector<1x384xf32>
    %22 = arith.subf %0, %21 : vector<1x384xf32>
    %c0_7 = arith.constant 0 : index
    %c0_8 = arith.constant 0 : index
    %23 = vector.load %arg3[%c0_7, %c0_8] : memref<1x384xf32, #tpu.memory_space<vmem>>, vector<1x384xf32>
    tpu.vector_store %arg3[%c0_7, %c0_8], %22 {strides = array<i32>} : memref<1x384xf32, #tpu.memory_space<vmem>>, vector<1x384xf32>,
    return
  }
  func.func @transform_0(%arg0: i32) -> (i32, i32) {
    %c0_i32 = arith.constant 0 : i32
    %c0_i32_0 = arith.constant 0 : i32
    return %arg0, %c0_i32 : i32, i32
  }
  func.func @transform_1(%arg0: i32) -> (i32, i32) {
    %c0_i32 = arith.constant 0 : i32
    %c0_i32_0 = arith.constant 0 : i32
    %c0_i32_1 = arith.constant 0 : i32
    return %c0_i32, %c0_i32_0 : i32, i32
  }
  func.func @transform_2(%arg0: i32) -> (i32, i32) {
    %c0_i32 = arith.constant 0 : i32
    %c0_i32_0 = arith.constant 0 : i32
    return %arg0, %c0_i32 : i32, i32
  }
}

module attributes {stable_mosaic.version = 11 : i64} {
  func.func @_scalar_sigmoid_kernel(%arg0: i32, %arg1: memref<1x512xf32, #tpu.memory_space<vmem>>, %arg2: memref<1x512xf32, #tpu.memory_space<vmem>>) attributes {dimension_semantics = [#tpu.dimension_semantics<parallel>], iteration_bounds = array<i64: 1>, scalar_prefetch = 0 : i64, scratch_operands = 0 : i64, tpu.core_type = #tpu.core_type<tc>, window_params = [{transform_indices = @transform_0, window_bounds = array<i64: 1, 512>}, {transform_indices = @transform_1, window_bounds = array<i64: 1, 512>}]} {
    %c0 = arith.constant 0 : index
    %c0_0 = arith.constant 0 : index
    %0 = vector.load %arg1[%c0, %c0_0] : memref<1x512xf32, #tpu.memory_space<vmem>>, vector<1x512xf32>
    %cst = arith.constant 5.000000e-01 : f32
    %1 = vector.broadcast %cst : f32 to vector<1x512xf32>
    %2 = arith.mulf %1, %0 : vector<1x512xf32>
    %3 = math.tanh %2 : vector<1x512xf32>
    %cst_1 = arith.constant 5.000000e-01 : f32
    %4 = vector.broadcast %cst_1 : f32 to vector<1x512xf32>
    %5 = arith.mulf %4, %3 : vector<1x512xf32>
    %cst_2 = arith.constant 5.000000e-01 : f32
    %6 = vector.broadcast %cst_2 : f32 to vector<1x512xf32>
    %7 = arith.addf %5, %6 : vector<1x512xf32>
    %c0_3 = arith.constant 0 : index
    %c0_4 = arith.constant 0 : index
    %8 = vector.load %arg2[%c0_3, %c0_4] : memref<1x512xf32, #tpu.memory_space<vmem>>, vector<1x512xf32>
    tpu.vector_store %arg2[%c0_3, %c0_4], %7 {strides = array<i32>} : memref<1x512xf32, #tpu.memory_space<vmem>>, vector<1x512xf32>,
    return
  }
  func.func @transform_0(%arg0: i32) -> (i32, i32) {
    %c0_i32 = arith.constant 0 : i32
    %c0_i32_0 = arith.constant 0 : i32
    return %arg0, %c0_i32 : i32, i32
  }
  func.func @transform_1(%arg0: i32) -> (i32, i32) {
    %c0_i32 = arith.constant 0 : i32
    %c0_i32_0 = arith.constant 0 : i32
    return %arg0, %c0_i32 : i32, i32
  }
}

</mosaic_0001>

<llo_original>
// kernel: tile.8
$region0: #{tile.8}
  %s0 = inlined_call_operand.vmem [shape: f32[32,12], index: 0, kind: input, shape index: {}]
  %s1 = inlined_call_operand.vmem [shape: f32[384], index: 1, kind: output, shape index: {}]
  $region1: #{tile.8} parent=0
    #allocation0 [shape = 'u8[4096]{0}', space=vmem, size = 0x1000, scoped, tag = 'scoped mem for output reshape']
    %v2 = vld [vmem:[%s0] sm:$0x1]
    %vm3 = vcmask 97280
    %4 = vst.msk [vmem:[#allocation0] sm:$0x1] %vm3, %v2
    %s5 = scalar_lea.vmem %s0, 21
    %v6 = vld [vmem:[%s5] sm:$0x1]
    %s7 = scalar_lea.vmem %s0, 21
    %v8 = vld [vmem:[%s7] sm:$0x1]
    %vm9 = vcmask 31744
    %v10 = vsel %vm9, %v8, %v6
    %11 = vrot.lane.b32.xlu0 %v10, 124
    %v12 = vpop.permute.xlu0 %11
    %vm13 = vcmask 64512
    %s14 = scalar_lea.vmem [#allocation0], 2
    %15 = vst.msk [vmem:[%s14] sm:$0x1] %vm13, %v12
    %vm16 = vcmask 1048544
    %s17 = scalar_lea.vmem [#allocation0], 1
    %18 = vst.msk [vmem:[%s17] sm:$0x1] %vm16, %v12
    %s19 = scalar_lea.vmem %s0, 10
    %v20 = vld [vmem:[%s19] sm:$0x1]
    %s21 = scalar_lea.vmem %s0, 10
    %v22 = vld [vmem:[%s21] sm:$0x1]
    %vm23 = vcmask 64512
    %v24 = vsel %vm23, %v22, %v20
    %25 = vrot.lane.b32.xlu0 %v24, 120
    %v26 = vpop.permute.xlu0 %25
    %vm27 = vcmask 31744
    %s28 = scalar_lea.vmem [#allocation0], 1
    %29 = vst.msk [vmem:[%s28] sm:$0x1] %vm27, %v26
    %vm30 = vcmask 1048512
    %31 = vst.msk [vmem:[#allocation0] sm:$0x1] %vm30, %v26
    %s32 = scalar_lea.vmem %s0, 31
    %v33 = vld [vmem:[%s32] sm:$0x1]
    %34 = vrot.lane.b32.xlu0 %v33, 116
    %v35 = vpop.permute.xlu0 %34
    %vm36 = vcmask 1048480
    %s37 = scalar_lea.vmem [#allocation0], 2
    %38 = vst.msk [vmem:[%s37] sm:$0x1] %vm36, %v35
    %s39 = scalar_lea.vmem %s0, 20
    %v40 = vld [vmem:[%s39] sm:$0x1]
    %41 = vrot.lane.b32.xlu0 %v40, 112
    %v42 = vpop.permute.xlu0 %41
    %vm43 = vcmask 1015680
    %s44 = scalar_lea.vmem [#allocation0], 1
    %45 = vst.msk [vmem:[%s44] sm:$0x1] %vm43, %v42
    %s46 = scalar_lea.vmem %s0, 9
    %v47 = vld [vmem:[%s46] sm:$0x1]
    %48 = vrot.lane.b32.xlu0 %v47, 108
    %v49 = vpop.permute.xlu0 %48
    %vm50 = vcmask 982880
    %51 = vst.msk [vmem:[#allocation0] sm:$0x1] %vm50, %v49
    %s52 = scalar_lea.vmem %s0, 30
    %v53 = vld [vmem:[%s52] sm:$0x1]
    %54 = vrot.lane.b32.xlu0 %v53, 104
    %v55 = vpop.permute.xlu0 %54
    %vm56 = vcmask 950080
    %s57 = scalar_lea.vmem [#allocation0], 2
    %58 = vst.msk [vmem:[%s57] sm:$0x1] %vm56, %v55
    %s59 = scalar_lea.vmem %s0, 19
    %v60 = vld [vmem:[%s59] sm:$0x1]
    %61 = vrot.lane.b32.xlu0 %v60, 100
    %v62 = vpop.permute.xlu0 %61
    %vm63 = vcmask 917280
    %s64 = scalar_lea.vmem [#allocation0], 1
    %65 = vst.msk [vmem:[%s64] sm:$0x1] %vm63, %v62
    %s66 = scalar_lea.vmem %s0, 8
    %v67 = vld [vmem:[%s66] sm:$0x1]
    %68 = vrot.lane.b32.xlu0 %v67, 96
    %v69 = vpop.permute.xlu0 %68
    %vm70 = vcmask 884480
    %71 = vst.msk [vmem:[#allocation0] sm:$0x1] %vm70, %v69
    %s72 = scalar_lea.vmem %s0, 29
    %v73 = vld [vmem:[%s72] sm:$0x1]
    %74 = vrot.lane.b32.xlu0 %v73, 92
    %v75 = vpop.permute.xlu0 %74
    %vm76 = vcmask 851680
    %s77 = scalar_lea.vmem [#allocation0], 2
    %78 = vst.msk [vmem:[%s77] sm:$0x1] %vm76, %v75
    %s79 = scalar_lea.vmem %s0, 18
    %v80 = vld [vmem:[%s79] sm:$0x1]
    %81 = vrot.lane.b32.xlu0 %v80, 88
    %v82 = vpop.permute.xlu0 %81
    %vm83 = vcmask 818880
    %s84 = scalar_lea.vmem [#allocation0], 1
    %85 = vst.msk [vmem:[%s84] sm:$0x1] %vm83, %v82
    %s86 = scalar_lea.vmem %s0, 7
    %v87 = vld [vmem:[%s86] sm:$0x1]
    %88 = vrot.lane.b32.xlu0 %v87, 84
    %v89 = vpop.permute.xlu0 %88
    %vm90 = vcmask 786080
    %91 = vst.msk [vmem:[#allocation0] sm:$0x1] %vm90, %v89
    %s92 = scalar_lea.vmem %s0, 28
    %v93 = vld [vmem:[%s92] sm:$0x1]
    %94 = vrot.lane.b32.xlu0 %v93, 80
    %v95 = vpop.permute.xlu0 %94
    %vm96 = vcmask 753280
    %s97 = scalar_lea.vmem [#allocation0], 2
    %98 = vst.msk [vmem:[%s97] sm:$0x1] %vm96, %v95
    %s99 = scalar_lea.vmem %s0, 17
    %v100 = vld [vmem:[%s99] sm:$0x1]
    %101 = vrot.lane.b32.xlu0 %v100, 76
    %v102 = vpop.permute.xlu0 %101
    %vm103 = vcmask 720480
    %s104 = scalar_lea.vmem [#allocation0], 1
    %105 = vst.msk [vmem:[%s104] sm:$0x1] %vm103, %v102
    %s106 = scalar_lea.vmem %s0, 6
    %v107 = vld [vmem:[%s106] sm:$0x1]
    %108 = vrot.lane.b32.xlu0 %v107, 72
    %v109 = vpop.permute.xlu0 %108
    %vm110 = vcmask 687680
    %111 = vst.msk [vmem:[#allocation0] sm:$0x1] %vm110, %v109
    %s112 = scalar_lea.vmem %s0, 27
    %v113 = vld [vmem:[%s112] sm:$0x1]
    %114 = vrot.lane.b32.xlu0 %v113, 68
    %v115 = vpop.permute.xlu0 %114
    %vm116 = vcmask 654880
    %s117 = scalar_lea.vmem [#allocation0], 2
    %118 = vst.msk [vmem:[%s117] sm:$0x1] %vm116, %v115
    %s119 = scalar_lea.vmem %s0, 16
    %v120 = vld [vmem:[%s119] sm:$0x1]
    %121 = vrot.lane.b32.xlu0 %v120, 64
    %v122 = vpop.permute.xlu0 %121
    %vm123 = vcmask 622080
    %s124 = scalar_lea.vmem [#allocation0], 1
    %125 = vst.msk [vmem:[%s124] sm:$0x1] %vm123, %v122
    %s126 = scalar_lea.vmem %s0, 5
    %v127 = vld [vmem:[%s126] sm:$0x1]
    %128 = vrot.lane.b32.xlu0 %v127, 60
    %v129 = vpop.permute.xlu0 %128
    %vm130 = vcmask 589280
    %131 = vst.msk [vmem:[#allocation0] sm:$0x1] %vm130, %v129
    %s132 = scalar_lea.vmem %s0, 26
    %v133 = vld [vmem:[%s132] sm:$0x1]
    %134 = vrot.lane.b32.xlu0 %v133, 56
    %v135 = vpop.permute.xlu0 %134
    %vm136 = vcmask 556480
    %s137 = scalar_lea.vmem [#allocation0], 2
    %138 = vst.msk [vmem:[%s137] sm:$0x1] %vm136, %v135
    %s139 = scalar_lea.vmem %s0, 15
    %v140 = vld [vmem:[%s139] sm:$0x1]
    %141 = vrot.lane.b32.xlu0 %v140, 52
    %v142 = vpop.permute.xlu0 %141
    %vm143 = vcmask 523680
    %s144 = scalar_lea.vmem [#allocation0], 1
    %145 = vst.msk [vmem:[%s144] sm:$0x1] %vm143, %v142
    %s146 = scalar_lea.vmem %s0, 4
    %v147 = vld [vmem:[%s146] sm:$0x1]
    %148 = vrot.lane.b32.xlu0 %v147, 48
    %v149 = vpop.permute.xlu0 %148
    %vm150 = vcmask 490880
    %151 = vst.msk [vmem:[#allocation0] sm:$0x1] %vm150, %v149
    %s152 = scalar_lea.vmem %s0, 25
    %v153 = vld [vmem:[%s152] sm:$0x1]
    %154 = vrot.lane.b32.xlu0 %v153, 44
    %v155 = vpop.permute.xlu0 %154
    %vm156 = vcmask 458080
    %s157 = scalar_lea.vmem [#allocation0], 2
    %158 = vst.msk [vmem:[%s157] sm:$0x1] %vm156, %v155
    %s159 = scalar_lea.vmem %s0, 14
    %v160 = vld [vmem:[%s159] sm:$0x1]
    %161 = vrot.lane.b32.xlu0 %v160, 40
    %v162 = vpop.permute.xlu0 %161
    %vm163 = vcmask 425280
    %s164 = scalar_lea.vmem [#allocation0], 1
    %165 = vst.msk [vmem:[%s164] sm:$0x1] %vm163, %v162
    %s166 = scalar_lea.vmem %s0, 3
    %v167 = vld [vmem:[%s166] sm:$0x1]
    %168 = vrot.lane.b32.xlu0 %v167, 36
    %v169 = vpop.permute.xlu0 %168
    %vm170 = vcmask 392480
    %171 = vst.msk [vmem:[#allocation0] sm:$0x1] %vm170, %v169
    %s172 = scalar_lea.vmem %s0, 24
    %v173 = vld [vmem:[%s172] sm:$0x1]
    %174 = vrot.lane.b32.xlu0 %v173, 32
    %v175 = vpop.permute.xlu0 %174
    %vm176 = vcmask 359680
    %s177 = scalar_lea.vmem [#allocation0], 2
    %178 = vst.msk [vmem:[%s177] sm:$0x1] %vm176, %v175
    %s179 = scalar_lea.vmem %s0, 13
    %v180 = vld [vmem:[%s179] sm:$0x1]
    %181 = vrot.lane.b32.xlu0 %v180, 28
    %v182 = vpop.permute.xlu0 %181
    %vm183 = vcmask 326880
    %s184 = scalar_lea.vmem [#allocation0], 1
    %185 = vst.msk [vmem:[%s184] sm:$0x1] %vm183, %v182
    %s186 = scalar_lea.vmem %s0, 2
    %v187 = vld [vmem:[%s186] sm:$0x1]
    %188 = vrot.lane.b32.xlu0 %v187, 24
    %v189 = vpop.permute.xlu0 %188
    %vm190 = vcmask 294080
    %191 = vst.msk [vmem:[#allocation0] sm:$0x1] %vm190, %v189
    %s192 = scalar_lea.vmem %s0, 23
    %v193 = vld [vmem:[%s192] sm:$0x1]
    %194 = vrot.lane.b32.xlu0 %v193, 20
    %v195 = vpop.permute.xlu0 %194
    %vm196 = vcmask 261280
    %s197 = scalar_lea.vmem [#allocation0], 2
    %198 = vst.msk [vmem:[%s197] sm:$0x1] %vm196, %v195
    %s199 = scalar_lea.vmem %s0, 12
    %v200 = vld [vmem:[%s199] sm:$0x1]
    %201 = vrot.lane.b32.xlu0 %v200, 16
    %v202 = vpop.permute.xlu0 %201
    %vm203 = vcmask 228480
    %s204 = scalar_lea.vmem [#allocation0], 1
    %205 = vst.msk [vmem:[%s204] sm:$0x1] %vm203, %v202
    %s206 = scalar_lea.vmem %s0, 1
    %v207 = vld [vmem:[%s206] sm:$0x1]
    %208 = vrot.lane.b32.xlu0 %v207, 12
    %v209 = vpop.permute.xlu0 %208
    %vm210 = vcmask 195680
    %211 = vst.msk [vmem:[#allocation0] sm:$0x1] %vm210, %v209
    %s212 = scalar_lea.vmem %s0, 22
    %v213 = vld [vmem:[%s212] sm:$0x1]
    %214 = vrot.lane.b32.xlu0 %v213, 8
    %v215 = vpop.permute.xlu0 %214
    %vm216 = vcmask 162880
    %s217 = scalar_lea.vmem [#allocation0], 2
    %218 = vst.msk [vmem:[%s217] sm:$0x1] %vm216, %v215
    %s219 = scalar_lea.vmem %s0, 11
    %v220 = vld [vmem:[%s219] sm:$0x1]
    %221 = vrot.lane.b32.xlu0 %v220, 4
    %v222 = vpop.permute.xlu0 %221
    %vm223 = vcmask 130080
    %s224 = scalar_lea.vmem [#allocation0], 1
    %225 = vst.msk [vmem:[%s224] sm:$0x1] %vm223, %v222
    %s227 = sshll.u32 1, 4
    %s228 = ssub.s32 %s227, 1
    %v230 = vld [vmem:[#allocation0] sm:%s228]
    %s231 = sshll.u32 1, 4
    %s232 = ssub.s32 %s231, 1
    %233 = vst [vmem:[%s1] sm:%s232] %v230

// kernel: tile.7
$region0: #{tile.7}
  #allocation0 [shape = 's32[1]{0}', space=sflag, size = 0x4, scoped, tag = 'scoped memory for tile.7']
  %s0 = inlined_call_operand.vmem [shape: f32[12], index: 0, kind: input, shape index: {}]
  %s1 = inlined_call_operand.vmem [shape: f32[32,12], index: 1, kind: output, shape index: {}]
  // Predicated region
  $region2: #{tile.7} parent=0 // pred_check
    _
  $region3: #{tile.7} parent=0 // pred_check_branch
    %3 = sbr.rel (0) target = $region5
  $region4: #{tile.7} parent=0 // pred_region
    _
  $region5: #{tile.7} parent=0 // pred_fallthru
    _
  %v4 = vld [vmem:[%s0] ss:$0 sm:$0xff]
  %5 = vst [vmem:[%s1] sm:$0xff] %v4
  %s6 = scalar_lea.vmem %s1, 8
  %7 = vst [vmem:[%s6] sm:$0xff] %v4
  %s8 = scalar_lea.vmem %s1, 16
  %9 = vst [vmem:[%s8] sm:$0xff] %v4
  %s10 = scalar_lea.vmem %s1, 24
  %11 = vst [vmem:[%s10] sm:$0xff] %v4

// kernel: tile.6
$region0: #{tile.6}
  %s0 = inlined_call_operand.hbm [shape: f32[4,3], index: 0, kind: input, shape index: {}]
  %s1 = inlined_call_operand.vmem [shape: f32[12], index: 1, kind: output, shape index: {}]
  $region1: #{tile.6} parent=0
    #allocation0 [shape = 'u8[2048]{0}', space=vmem, size = 0x800, scoped, tag = 'operand span for operand 0']
    #allocation1 [shape = 's32[1]{0}', space=sflag, size = 0x4, scoped, tag = 'scoped memory for tile.6']
    #allocation2 [shape = 'u8[4096]{0}', space=vmem, size = 0x1000, scoped, tag = 'scoped mem for output reshape']
    #allocation3 [shape = 'u8[4096]{0}', space=vmem, size = 0x1000, scoped, tag = 'scoped mem for input reshape']
    %2 = vsyncpa [#allocation1], 0
    %s4 = ssub.s32 64, 64
    %5 = vsyncadd [#allocation1], %s4
    %s7 = sshll.u32 [#allocation0], 4
    %s8 = int_to_ptr.vmem [resolvable:$true] %s7
    %10 = dma.hbm_to_vmem [thread:$0]  %s0, 64, %s8, [#allocation1]
    %11 = dma.done [#allocation1], 64
    %s13 = sshll.u32 1, 4
    %s14 = ssub.s32 %s13, 1
    %v15 = vld [vmem:[#allocation0] sm:%s14]
    %16 = vst [vmem:[#allocation3] sm:%s14] %v15
    %v17 = vld [vmem:[#allocation3] sm:$0x1]
    %vm18 = vcmask 23552
    %19 = vst.msk [vmem:[#allocation2] sm:$0x1] %vm18, %v17
    %s20 = scalar_lea.vmem [#allocation3], 3
    %v21 = vld [vmem:[%s20] sm:$0x1]
    %22 = vrot.lane.b32.xlu0 %v21, 9
    %v23 = vpop.permute.xlu0 %22
    %vm24 = vcmask 97352
    %25 = vst.msk [vmem:[#allocation2] sm:$0x1] %vm24, %v23
    %s26 = scalar_lea.vmem [#allocation3], 2
    %v27 = vld [vmem:[%s26] sm:$0x1]
    %28 = vrot.lane.b32.xlu0 %v27, 6
    %v29 = vpop.permute.xlu0 %28
    %vm30 = vcmask 72752
    %31 = vst.msk [vmem:[#allocation2] sm:$0x1] %vm30, %v29
    %s32 = scalar_lea.vmem [#allocation3], 1
    %v33 = vld [vmem:[%s32] sm:$0x1]
    %34 = vrot.lane.b32.xlu0 %v33, 3
    %v35 = vpop.permute.xlu0 %34
    %vm36 = vcmask 48152
    %37 = vst.msk [vmem:[#allocation2] sm:$0x1] %vm36, %v35
    %s39 = sshll.u32 1, 1
    %s40 = ssub.s32 %s39, 1
    %v42 = vld [vmem:[#allocation2] sm:%s40]
    %s43 = sshll.u32 1, 1
    %s44 = ssub.s32 %s43, 1
    %45 = vst [vmem:[%s1] sm:%s44] %v42
    %46 = vsyncpa [#allocation1], 1

// kernel: tile.9
$region0: #{tile.9}
  %s0 = inlined_call_operand.vmem [shape: f32[32,12], index: 0, kind: input, shape index: {}]
  %s1 = inlined_call_operand.vmem [shape: f32[1,384], index: 1, kind: output, shape index: {}]
  $region1: #{tile.9} parent=0
    #allocation0 [shape = 'u8[12288]{0}', space=vmem, size = 0x3000, scoped, tag = 'scoped mem for output reshape']
    %v2 = vld [vmem:[%s0] sm:$0x1]
    %vm3 = vcmask 97280
    %4 = vst.msk [vmem:[#allocation0] sm:$0x1] %vm3, %v2
    %s5 = scalar_lea.vmem %s0, 21
    %v6 = vld [vmem:[%s5] sm:$0x1]
    %s7 = scalar_lea.vmem %s0, 21
    %v8 = vld [vmem:[%s7] sm:$0x1]
    %vm9 = vcmask 31744
    %v10 = vsel %vm9, %v8, %v6
    %11 = vrot.lane.b32.xlu0 %v10, 124
    %v12 = vpop.permute.xlu0 %11
    %vm13 = vcmask 64512
    %s14 = scalar_lea.vmem [#allocation0], 16
    %15 = vst.msk [vmem:[%s14] sm:$0x1] %vm13, %v12
    %vm16 = vcmask 1048544
    %s17 = scalar_lea.vmem [#allocation0], 8
    %18 = vst.msk [vmem:[%s17] sm:$0x1] %vm16, %v12
    %s19 = scalar_lea.vmem %s0, 10
    %v20 = vld [vmem:[%s19] sm:$0x1]
    %s21 = scalar_lea.vmem %s0, 10
    %v22 = vld [vmem:[%s21] sm:$0x1]
    %vm23 = vcmask 64512
    %v24 = vsel %vm23, %v22, %v20
    %25 = vrot.lane.b32.xlu0 %v24, 120
    %v26 = vpop.permute.xlu0 %25
    %vm27 = vcmask 31744
    %s28 = scalar_lea.vmem [#allocation0], 8
    %29 = vst.msk [vmem:[%s28] sm:$0x1] %vm27, %v26
    %vm30 = vcmask 1048512
    %31 = vst.msk [vmem:[#allocation0] sm:$0x1] %vm30, %v26
    %s32 = scalar_lea.vmem %s0, 31
    %v33 = vld [vmem:[%s32] sm:$0x1]
    %34 = vrot.lane.b32.xlu0 %v33, 116
    %v35 = vpop.permute.xlu0 %34
    %vm36 = vcmask 1048480
    %s37 = scalar_lea.vmem [#allocation0], 16
    %38 = vst.msk [vmem:[%s37] sm:$0x1] %vm36, %v35
    %s39 = scalar_lea.vmem %s0, 20
    %v40 = vld [vmem:[%s39] sm:$0x1]
    %41 = vrot.lane.b32.xlu0 %v40, 112
    %v42 = vpop.permute.xlu0 %41
    %vm43 = vcmask 1015680
    %s44 = scalar_lea.vmem [#allocation0], 8
    %45 = vst.msk [vmem:[%s44] sm:$0x1] %vm43, %v42
    %s46 = scalar_lea.vmem %s0, 9
    %v47 = vld [vmem:[%s46] sm:$0x1]
    %48 = vrot.lane.b32.xlu0 %v47, 108
    %v49 = vpop.permute.xlu0 %48
    %vm50 = vcmask 982880
    %51 = vst.msk [vmem:[#allocation0] sm:$0x1] %vm50, %v49
    %s52 = scalar_lea.vmem %s0, 30
    %v53 = vld [vmem:[%s52] sm:$0x1]
    %54 = vrot.lane.b32.xlu0 %v53, 104
    %v55 = vpop.permute.xlu0 %54
    %vm56 = vcmask 950080
    %s57 = scalar_lea.vmem [#allocation0], 16
    %58 = vst.msk [vmem:[%s57] sm:$0x1] %vm56, %v55
    %s59 = scalar_lea.vmem %s0, 19
    %v60 = vld [vmem:[%s59] sm:$0x1]
    %61 = vrot.lane.b32.xlu0 %v60, 100
    %v62 = vpop.permute.xlu0 %61
    %vm63 = vcmask 917280
    %s64 = scalar_lea.vmem [#allocation0], 8
    %65 = vst.msk [vmem:[%s64] sm:$0x1] %vm63, %v62
    %s66 = scalar_lea.vmem %s0, 8
    %v67 = vld [vmem:[%s66] sm:$0x1]
    %68 = vrot.lane.b32.xlu0 %v67, 96
    %v69 = vpop.permute.xlu0 %68
    %vm70 = vcmask 884480
    %71 = vst.msk [vmem:[#allocation0] sm:$0x1] %vm70, %v69
    %s72 = scalar_lea.vmem %s0, 29
    %v73 = vld [vmem:[%s72] sm:$0x1]
    %74 = vrot.lane.b32.xlu0 %v73, 92
    %v75 = vpop.permute.xlu0 %74
    %vm76 = vcmask 851680
    %s77 = scalar_lea.vmem [#allocation0], 16
    %78 = vst.msk [vmem:[%s77] sm:$0x1] %vm76, %v75
    %s79 = scalar_lea.vmem %s0, 18
    %v80 = vld [vmem:[%s79] sm:$0x1]
    %81 = vrot.lane.b32.xlu0 %v80, 88
    %v82 = vpop.permute.xlu0 %81
    %vm83 = vcmask 818880
    %s84 = scalar_lea.vmem [#allocation0], 8
    %85 = vst.msk [vmem:[%s84] sm:$0x1] %vm83, %v82
    %s86 = scalar_lea.vmem %s0, 7
    %v87 = vld [vmem:[%s86] sm:$0x1]
    %88 = vrot.lane.b32.xlu0 %v87, 84
    %v89 = vpop.permute.xlu0 %88
    %vm90 = vcmask 786080
    %91 = vst.msk [vmem:[#allocation0] sm:$0x1] %vm90, %v89
    %s92 = scalar_lea.vmem %s0, 28
    %v93 = vld [vmem:[%s92] sm:$0x1]
    %94 = vrot.lane.b32.xlu0 %v93, 80
    %v95 = vpop.permute.xlu0 %94
    %vm96 = vcmask 753280
    %s97 = scalar_lea.vmem [#allocation0], 16
    %98 = vst.msk [vmem:[%s97] sm:$0x1] %vm96, %v95
    %s99 = scalar_lea.vmem %s0, 17
    %v100 = vld [vmem:[%s99] sm:$0x1]
    %101 = vrot.lane.b32.xlu0 %v100, 76
    %v102 = vpop.permute.xlu0 %101
    %vm103 = vcmask 720480
    %s104 = scalar_lea.vmem [#allocation0], 8
    %105 = vst.msk [vmem:[%s104] sm:$0x1] %vm103, %v102
    %s106 = scalar_lea.vmem %s0, 6
    %v107 = vld [vmem:[%s106] sm:$0x1]
    %108 = vrot.lane.b32.xlu0 %v107, 72
    %v109 = vpop.permute.xlu0 %108
    %vm110 = vcmask 687680
    %111 = vst.msk [vmem:[#allocation0] sm:$0x1] %vm110, %v109
    %s112 = scalar_lea.vmem %s0, 27
    %v113 = vld [vmem:[%s112] sm:$0x1]
    %114 = vrot.lane.b32.xlu0 %v113, 68
    %v115 = vpop.permute.xlu0 %114
    %vm116 = vcmask 654880
    %s117 = scalar_lea.vmem [#allocation0], 16
    %118 = vst.msk [vmem:[%s117] sm:$0x1] %vm116, %v115
    %s119 = scalar_lea.vmem %s0, 16
    %v120 = vld [vmem:[%s119] sm:$0x1]
    %121 = vrot.lane.b32.xlu0 %v120, 64
    %v122 = vpop.permute.xlu0 %121
    %vm123 = vcmask 622080
    %s124 = scalar_lea.vmem [#allocation0], 8
    %125 = vst.msk [vmem:[%s124] sm:$0x1] %vm123, %v122
    %s126 = scalar_lea.vmem %s0, 5
    %v127 = vld [vmem:[%s126] sm:$0x1]
    %128 = vrot.lane.b32.xlu0 %v127, 60
    %v129 = vpop.permute.xlu0 %128
    %vm130 = vcmask 589280
    %131 = vst.msk [vmem:[#allocation0] sm:$0x1] %vm130, %v129
    %s132 = scalar_lea.vmem %s0, 26
    %v133 = vld [vmem:[%s132] sm:$0x1]
    %134 = vrot.lane.b32.xlu0 %v133, 56
    %v135 = vpop.permute.xlu0 %134
    %vm136 = vcmask 556480
    %s137 = scalar_lea.vmem [#allocation0], 16
    %138 = vst.msk [vmem:[%s137] sm:$0x1] %vm136, %v135
    %s139 = scalar_lea.vmem %s0, 15
    %v140 = vld [vmem:[%s139] sm:$0x1]
    %141 = vrot.lane.b32.xlu0 %v140, 52
    %v142 = vpop.permute.xlu0 %141
    %vm143 = vcmask 523680
    %s144 = scalar_lea.vmem [#allocation0], 8
    %145 = vst.msk [vmem:[%s144] sm:$0x1] %vm143, %v142
    %s146 = scalar_lea.vmem %s0, 4
    %v147 = vld [vmem:[%s146] sm:$0x1]
    %148 = vrot.lane.b32.xlu0 %v147, 48
    %v149 = vpop.permute.xlu0 %148
    %vm150 = vcmask 490880
    %151 = vst.msk [vmem:[#allocation0] sm:$0x1] %vm150, %v149
    %s152 = scalar_lea.vmem %s0, 25
    %v153 = vld [vmem:[%s152] sm:$0x1]
    %154 = vrot.lane.b32.xlu0 %v153, 44
    %v155 = vpop.permute.xlu0 %154
    %vm156 = vcmask 458080
    %s157 = scalar_lea.vmem [#allocation0], 16
    %158 = vst.msk [vmem:[%s157] sm:$0x1] %vm156, %v155
    %s159 = scalar_lea.vmem %s0, 14
    %v160 = vld [vmem:[%s159] sm:$0x1]
    %161 = vrot.lane.b32.xlu0 %v160, 40
    %v162 = vpop.permute.xlu0 %161
    %vm163 = vcmask 425280
    %s164 = scalar_lea.vmem [#allocation0], 8
    %165 = vst.msk [vmem:[%s164] sm:$0x1] %vm163, %v162
    %s166 = scalar_lea.vmem %s0, 3
    %v167 = vld [vmem:[%s166] sm:$0x1]
    %168 = vrot.lane.b32.xlu0 %v167, 36
    %v169 = vpop.permute.xlu0 %168
    %vm170 = vcmask 392480
    %171 = vst.msk [vmem:[#allocation0] sm:$0x1] %vm170, %v169
    %s172 = scalar_lea.vmem %s0, 24
    %v173 = vld [vmem:[%s172] sm:$0x1]
    %174 = vrot.lane.b32.xlu0 %v173, 32
    %v175 = vpop.permute.xlu0 %174
    %vm176 = vcmask 359680
    %s177 = scalar_lea.vmem [#allocation0], 16
    %178 = vst.msk [vmem:[%s177] sm:$0x1] %vm176, %v175
    %s179 = scalar_lea.vmem %s0, 13
    %v180 = vld [vmem:[%s179] sm:$0x1]
    %181 = vrot.lane.b32.xlu0 %v180, 28
    %v182 = vpop.permute.xlu0 %181
    %vm183 = vcmask 326880
    %s184 = scalar_lea.vmem [#allocation0], 8
    %185 = vst.msk [vmem:[%s184] sm:$0x1] %vm183, %v182
    %s186 = scalar_lea.vmem %s0, 2
    %v187 = vld [vmem:[%s186] sm:$0x1]
    %188 = vrot.lane.b32.xlu0 %v187, 24
    %v189 = vpop.permute.xlu0 %188
    %vm190 = vcmask 294080
    %191 = vst.msk [vmem:[#allocation0] sm:$0x1] %vm190, %v189
    %s192 = scalar_lea.vmem %s0, 23
    %v193 = vld [vmem:[%s192] sm:$0x1]
    %194 = vrot.lane.b32.xlu0 %v193, 20
    %v195 = vpop.permute.xlu0 %194
    %vm196 = vcmask 261280
    %s197 = scalar_lea.vmem [#allocation0], 16
    %198 = vst.msk [vmem:[%s197] sm:$0x1] %vm196, %v195
    %s199 = scalar_lea.vmem %s0, 12
    %v200 = vld [vmem:[%s199] sm:$0x1]
    %201 = vrot.lane.b32.xlu0 %v200, 16
    %v202 = vpop.permute.xlu0 %201
    %vm203 = vcmask 228480
    %s204 = scalar_lea.vmem [#allocation0], 8
    %205 = vst.msk [vmem:[%s204] sm:$0x1] %vm203, %v202
    %s206 = scalar_lea.vmem %s0, 1
    %v207 = vld [vmem:[%s206] sm:$0x1]
    %208 = vrot.lane.b32.xlu0 %v207, 12
    %v209 = vpop.permute.xlu0 %208
    %vm210 = vcmask 195680
    %211 = vst.msk [vmem:[#allocation0] sm:$0x1] %vm210, %v209
    %s212 = scalar_lea.vmem %s0, 22
    %v213 = vld [vmem:[%s212] sm:$0x1]
    %214 = vrot.lane.b32.xlu0 %v213, 8
    %v215 = vpop.permute.xlu0 %214
    %vm216 = vcmask 162880
    %s217 = scalar_lea.vmem [#allocation0], 16
    %218 = vst.msk [vmem:[%s217] sm:$0x1] %vm216, %v215
    %s219 = scalar_lea.vmem %s0, 11
    %v220 = vld [vmem:[%s219] sm:$0x1]
    %221 = vrot.lane.b32.xlu0 %v220, 4
    %v222 = vpop.permute.xlu0 %221
    %vm223 = vcmask 130080
    %s224 = scalar_lea.vmem [#allocation0], 8
    %225 = vst.msk [vmem:[%s224] sm:$0x1] %vm223, %v222
    %s227 = sshll.u32 1, 1
    %s228 = ssub.s32 %s227, 1
    %v230 = vld [vmem:[#allocation0] sm:%s228]
    %s231 = sshll.u32 1, 1
    %s232 = ssub.s32 %s231, 1
    %233 = vst [vmem:[%s1] sm:%s232] %v230
    %s234 = scalar_lea.vmem [#allocation0], 8
    %v235 = vld [vmem:[%s234] sm:%s228]
    %s236 = sshll.u32 1, 1
    %s237 = ssub.s32 %s236, 1
    %s238 = scalar_lea.vmem %s1, 1
    %239 = vst [vmem:[%s238] sm:%s237] %v235
    %s240 = scalar_lea.vmem [#allocation0], 16
    %v241 = vld [vmem:[%s240] sm:%s228]
    %s242 = sshll.u32 1, 1
    %s243 = ssub.s32 %s242, 1
    %s244 = smul.addr 1, 2
    %s245 = scalar_lea.vmem %s1, %s244
    %246 = vst [vmem:[%s245] sm:%s243] %v241

// kernel: sv_activation.2
$region0: #{sv_activation.2}
  #allocation0 [shape = 'u32[]', space=smem, size = 0x4, offset = 0x4, fixed_abs, tag = 'smem constant byte address 0x4 - core index']
  #allocation1 [shape = 'u32[144,128]{1,0:T(1,128)}', space=vmem, size = 0x12000, scoped, tag = 'internal scratch']
  %s0 = inlined_call_operand.vmem [shape: f32[1,512], index: 0, kind: input, shape index: {}]
  %s1 = inlined_call_operand.vmem [shape: f32[1,512], index: 1, kind: output, shape index: {}]
  %s2 = sld [smem:[#allocation0]]
  $region14: #{sv_activation.2} parent=0
    _
  %s4 = ssub.s32 1, %s2
  %s5 = scalar_select 0, %s4, %s2
  // Predicated region
  $region2: #{sv_activation.2} parent=0 // pred_check
    _
  $region3: #{sv_activation.2} parent=0 // pred_check_branch
    %7 = sbr.rel (0) target = $region5
  $region4: #{sv_activation.2} parent=0 // pred_region
    _
  $region5: #{sv_activation.2} parent=0 // pred_fallthru
    _
  %v8 = vld [vmem:[%s0] sm:$0xf]
  %v9 = vmul.f32 %v8, 0.5
  %v10 = vtanh.pop %v9
  %v11 = vmul.f32 %v10, 0.5
  %v12 = vadd.f32 %v11, 0.5
  %v13 = vlaneseq
  %vm14 = vcmp.ge.s32.totalorder %v13, 0
  %vm15 = vcmp.lt.s32.totalorder %v13, 512
  %vm16 = vmand %vm14, %vm15
  %17 = vst.msk [vmem:[%s1] sm:$0xf] %vm16, %v12
  // Predicated region
  $region6: #{sv_activation.2} parent=0 // pred_check
    _
  $region7: #{sv_activation.2} parent=0 // pred_check_branch
    %19 = sbr.rel (0) target = $region9
  $region8: #{sv_activation.2} parent=0 // pred_region
    _
  $region9: #{sv_activation.2} parent=0 // pred_fallthru
    _
  // Predicated region
  $region10: #{sv_activation.2} parent=0 // pred_check
    _
  $region11: #{sv_activation.2} parent=0 // pred_check_branch
    %21 = sbr.rel (0) target = $region13
  $region12: #{sv_activation.2} parent=0 // pred_region
    _
  $region13: #{sv_activation.2} parent=0 // pred_fallthru
    _

// kernel: sv_activation.3
$region0: #{sv_activation.3}
  #allocation0 [shape = 'u32[]', space=smem, size = 0x4, offset = 0x4, fixed_abs, tag = 'smem constant byte address 0x4 - core index']
  #allocation1 [shape = 'u32[144,128]{1,0:T(1,128)}', space=vmem, size = 0x12000, scoped, tag = 'internal scratch']
  %s0 = inlined_call_operand.vmem [shape: f32[1,384], index: 0, kind: input, shape index: {}]
  %s1 = inlined_call_operand.vmem [shape: f32[8,384], index: 1, kind: input, shape index: {}]
  %s2 = inlined_call_operand.vmem [shape: f32[1,384], index: 2, kind: output, shape index: {}]
  %s3 = sld [smem:[#allocation0]]
  $region18: #{sv_activation.3} parent=0
    _
  %s5 = ssub.s32 1, %s3
  %s6 = scalar_select 0, %s5, %s3
  // Predicated region
  $region2: #{sv_activation.3} parent=0 // pred_check
    _
  $region3: #{sv_activation.3} parent=0 // pred_check_branch
    %8 = sbr.rel (0) target = $region5
  $region4: #{sv_activation.3} parent=0 // pred_region
    _
  $region5: #{sv_activation.3} parent=0 // pred_fallthru
    _
  // Predicated region
  $region6: #{sv_activation.3} parent=0 // pred_check
    _
  $region7: #{sv_activation.3} parent=0 // pred_check_branch
    %10 = sbr.rel (0) target = $region9
  $region8: #{sv_activation.3} parent=0 // pred_region
    _
  $region9: #{sv_activation.3} parent=0 // pred_fallthru
    _
  %v11 = vld [vmem:[%s0] sm:$0x7]
  %v12 = vld [vmem:[%s1] ss:$8 sm:$0x7]
  %v13 = vmul.f32 %v11, %v12
  %v15 = vlaneseq
  %v16 = vshrl.u32 %v15, 7
  %v17 = vsub.s32 0, %v16
  %v18 = vrot.slane %v11, %v17
  %v19 = vlaneseq
  %v20 = vshrl.u32 %v19, 7
  %v21 = vsub.s32 1, %v20
  %v22 = vrot.slane %v11, %v21
  %v23 = vlaneseq
  %v24 = vshrl.u32 %v23, 7
  %v25 = vsub.s32 2, %v24
  %v26 = vrot.slane %v11, %v25
  %30 = vrot.lane.b32.xlu0 %v18, 1
  %v31 = vpop.permute.xlu0 %30
  %32 = vrot.lane.b32.xlu0 %v22, 1
  %v33 = vpop.permute.xlu0 %32
  %34 = vrot.lane.b32.xlu0 %v26, 1
  %v35 = vpop.permute.xlu0 %34
  %v36 = vlaneseq
  %v37 = vand.u32 %v36, 127
  %vm38 = vcmp.lt.s32.totalorder %v37, 1
  %v39 = vsel %vm38, %v33, %v35
  %v40 = vsel %vm38, %v31, %v33
  %v41 = vsel %vm38, %v35, %v31
  %s42 = scalar_lea.vmem %s1, 1
  %v43 = vld [vmem:[%s42] ss:$8 sm:$0x7]
  %v45 = vlaneseq
  %v46 = vshrl.u32 %v45, 7
  %v47 = vsub.s32 0, %v46
  %v48 = vrot.slane %v43, %v47
  %v49 = vlaneseq
  %v50 = vshrl.u32 %v49, 7
  %v51 = vsub.s32 1, %v50
  %v52 = vrot.slane %v43, %v51
  %v53 = vlaneseq
  %v54 = vshrl.u32 %v53, 7
  %v55 = vsub.s32 2, %v54
  %v56 = vrot.slane %v43, %v55
  %v60 = vmul.f32 %v41, %v48
  %v61 = vmul.f32 %v40, %v52
  %v62 = vmul.f32 %v39, %v56
  %v66 = vcombine.low %v60, %v61
  %v68 = vunpack.c.l.s4 1966171168
  %v69 = vunpack.c.0.s8 %v68
  %v70 = vlaneseq
  %v71 = vshrl.u32 %v70, 7
  %v72 = vsub.s32 %v69, %v71
  %v73 = vrot.slane %v66, %v72
  %v75 = vunpack.c.l.s4 1966171168
  %v76 = vunpack.c.0.s8 %v75
  %v77 = vlaneseq
  %v78 = vshrl.u32 %v77, 7
  %v79 = vsub.s32 %v76, %v78
  %v80 = vrot.slane %v62, %v79
  %v81 = vcombine.low %v73, %v80
  %v83 = vunpack.c.l.s4 1966171168
  %v84 = vunpack.c.0.s8 %v83
  %v85 = vlaneseq
  %v86 = vshrl.u32 %v85, 7
  %v87 = vsub.s32 %v84, %v86
  %v88 = vrot.slane %v81, %v87
  %v90 = vadd.f32 %v13, %v88
  %91 = vrot.lane.b32.xlu0 %v18, 2
  %v92 = vpop.permute.xlu0 %91
  %93 = vrot.lane.b32.xlu0 %v22, 2
  %v94 = vpop.permute.xlu0 %93
  %95 = vrot.lane.b32.xlu0 %v26, 2
  %v96 = vpop.permute.xlu0 %95
  %vm97 = vcmp.lt.s32.totalorder %v37, 2
  %v98 = vsel %vm97, %v94, %v96
  %v99 = vsel %vm97, %v92, %v94
  %v100 = vsel %vm97, %v96, %v92
  %s101 = scalar_lea.vmem %s1, 2
  %v102 = vld [vmem:[%s101] ss:$8 sm:$0x7]
  %v104 = vlaneseq
  %v105 = vshrl.u32 %v104, 7
  %v106 = vsub.s32 0, %v105
  %v107 = vrot.slane %v102, %v106
  %v108 = vlaneseq
  %v109 = vshrl.u32 %v108, 7
  %v110 = vsub.s32 1, %v109
  %v111 = vrot.slane %v102, %v110
  %v112 = vlaneseq
  %v113 = vshrl.u32 %v112, 7
  %v114 = vsub.s32 2, %v113
  %v115 = vrot.slane %v102, %v114
  %v119 = vmul.f32 %v100, %v107
  %v120 = vmul.f32 %v99, %v111
  %v121 = vmul.f32 %v98, %v115
  %v125 = vcombine.low %v119, %v120
  %v127 = vunpack.c.l.s4 1966171168
  %v128 = vunpack.c.0.s8 %v127
  %v129 = vlaneseq
  %v130 = vshrl.u32 %v129, 7
  %v131 = vsub.s32 %v128, %v130
  %v132 = vrot.slane %v125, %v131
  %v134 = vunpack.c.l.s4 1966171168
  %v135 = vunpack.c.0.s8 %v134
  %v136 = vlaneseq
  %v137 = vshrl.u32 %v136, 7
  %v138 = vsub.s32 %v135, %v137
  %v139 = vrot.slane %v121, %v138
  %v140 = vcombine.low %v132, %v139
  %v142 = vunpack.c.l.s4 1966171168
  %v143 = vunpack.c.0.s8 %v142
  %v144 = vlaneseq
  %v145 = vshrl.u32 %v144, 7
  %v146 = vsub.s32 %v143, %v145
  %v147 = vrot.slane %v140, %v146
  %v149 = vadd.f32 %v90, %v147
  %150 = vrot.lane.b32.xlu0 %v18, 127
  %v151 = vpop.permute.xlu0 %150
  %152 = vrot.lane.b32.xlu0 %v22, 127
  %v153 = vpop.permute.xlu0 %152
  %154 = vrot.lane.b32.xlu0 %v26, 127
  %v155 = vpop.permute.xlu0 %154
  %vm156 = vcmp.lt.s32.totalorder %v37, 127
  %v157 = vsel %vm156, %v153, %v155
  %v158 = vsel %vm156, %v151, %v153
  %v159 = vsel %vm156, %v155, %v151
  %s160 = scalar_lea.vmem %s1, 3
  %v161 = vld [vmem:[%s160] ss:$8 sm:$0x7]
  %v163 = vlaneseq
  %v164 = vshrl.u32 %v163, 7
  %v165 = vsub.s32 0, %v164
  %v166 = vrot.slane %v161, %v165
  %v167 = vlaneseq
  %v168 = vshrl.u32 %v167, 7
  %v169 = vsub.s32 1, %v168
  %v170 = vrot.slane %v161, %v169
  %v171 = vlaneseq
  %v172 = vshrl.u32 %v171, 7
  %v173 = vsub.s32 2, %v172
  %v174 = vrot.slane %v161, %v173
  %v178 = vmul.f32 %v158, %v166
  %v179 = vmul.f32 %v157, %v170
  %v180 = vmul.f32 %v159, %v174
  %v184 = vcombine.low %v178, %v179
  %v186 = vunpack.c.l.s4 1966171168
  %v187 = vunpack.c.0.s8 %v186
  %v188 = vlaneseq
  %v189 = vshrl.u32 %v188, 7
  %v190 = vsub.s32 %v187, %v189
  %v191 = vrot.slane %v184, %v190
  %v193 = vunpack.c.l.s4 1966171168
  %v194 = vunpack.c.0.s8 %v193
  %v195 = vlaneseq
  %v196 = vshrl.u32 %v195, 7
  %v197 = vsub.s32 %v194, %v196
  %v198 = vrot.slane %v180, %v197
  %v199 = vcombine.low %v191, %v198
  %v201 = vunpack.c.l.s4 1966171168
  %v202 = vunpack.c.0.s8 %v201
  %v203 = vlaneseq
  %v204 = vshrl.u32 %v203, 7
  %v205 = vsub.s32 %v202, %v204
  %v206 = vrot.slane %v199, %v205
  %v208 = vadd.f32 %v149, %v206
  %209 = vrot.lane.b32.xlu0 %v18, 126
  %v210 = vpop.permute.xlu0 %209
  %211 = vrot.lane.b32.xlu0 %v22, 126
  %v212 = vpop.permute.xlu0 %211
  %213 = vrot.lane.b32.xlu0 %v26, 126
  %v214 = vpop.permute.xlu0 %213
  %vm215 = vcmp.lt.s32.totalorder %v37, 126
  %v216 = vsel %vm215, %v212, %v214
  %v217 = vsel %vm215, %v210, %v212
  %v218 = vsel %vm215, %v214, %v210
  %s219 = scalar_lea.vmem %s1, 4
  %v220 = vld [vmem:[%s219] ss:$8 sm:$0x7]
  %v222 = vlaneseq
  %v223 = vshrl.u32 %v222, 7
  %v224 = vsub.s32 0, %v223
  %v225 = vrot.slane %v220, %v224
  %v226 = vlaneseq
  %v227 = vshrl.u32 %v226, 7
  %v228 = vsub.s32 1, %v227
  %v229 = vrot.slane %v220, %v228
  %v230 = vlaneseq
  %v231 = vshrl.u32 %v230, 7
  %v232 = vsub.s32 2, %v231
  %v233 = vrot.slane %v220, %v232
  %v237 = vmul.f32 %v217, %v225
  %v238 = vmul.f32 %v216, %v229
  %v239 = vmul.f32 %v218, %v233
  %v243 = vcombine.low %v237, %v238
  %v245 = vunpack.c.l.s4 1966171168
  %v246 = vunpack.c.0.s8 %v245
  %v247 = vlaneseq
  %v248 = vshrl.u32 %v247, 7
  %v249 = vsub.s32 %v246, %v248
  %v250 = vrot.slane %v243, %v249
  %v252 = vunpack.c.l.s4 1966171168
  %v253 = vunpack.c.0.s8 %v252
  %v254 = vlaneseq
  %v255 = vshrl.u32 %v254, 7
  %v256 = vsub.s32 %v253, %v255
  %v257 = vrot.slane %v239, %v256
  %v258 = vcombine.low %v250, %v257
  %v260 = vunpack.c.l.s4 1966171168
  %v261 = vunpack.c.0.s8 %v260
  %v262 = vlaneseq
  %v263 = vshrl.u32 %v262, 7
  %v264 = vsub.s32 %v261, %v263
  %v265 = vrot.slane %v258, %v264
  %v267 = vadd.f32 %v208, %v265
  %v268 = vmin.f32 %v267, 0.0
  %v269 = vmul.f32 %v268, %v12
  %v270 = vsub.f32 %v11, %v269
  %v271 = vlaneseq
  %vm272 = vcmp.ge.s32.totalorder %v271, 0
  %vm273 = vcmp.lt.s32.totalorder %v271, 384
  %vm274 = vmand %vm272, %vm273
  %275 = vst.msk [vmem:[%s2] sm:$0x7] %vm274, %v270
  // Predicated region
  $region10: #{sv_activation.3} parent=0 // pred_check
    _
  $region11: #{sv_activation.3} parent=0 // pred_check_branch
    %277 = sbr.rel (0) target = $region13
  $region12: #{sv_activation.3} parent=0 // pred_region
    _
  $region13: #{sv_activation.3} parent=0 // pred_fallthru
    _
  // Predicated region
  $region14: #{sv_activation.3} parent=0 // pred_check
    _
  $region15: #{sv_activation.3} parent=0 // pred_check_branch
    %279 = sbr.rel (0) target = $region17
  $region16: #{sv_activation.3} parent=0 // pred_region
    _
  $region17: #{sv_activation.3} parent=0 // pred_fallthru
    _

</llo_original>
